<compile_context>
chip_gen: v7x
topology: tpu7x:2x2x1
jax: 0.10.0
libtpu: 0.0.40
codegen_flags: <defaults>
</compile_context>

<pallas_src>
import functools

import jax
import jax.numpy as jnp
from jax.experimental import pallas as pl
from jax.experimental.pallas import tpu as pltpu

_LANES = 128
# (2048, 128) f32 block = 1 MiB per buffer; 3 operands x 2 buffers ~= 6 MiB VMEM.
_MAX_BLOCK_ROWS = 2048


def _sublane_multiple(dtype) -> int:
    """Minimum second-to-last tile dim for a dtype (8 f32 / 16 bf16 / 32 int8)."""
    return max(8, 32 // jnp.dtype(dtype).itemsize)


def _focal_loss_tile(x, t, alpha: float, gamma: float):
    """Elementwise binary focal loss on one f32 tile (3 EUP transcendentals/elem)."""
    log_sig_pos = jax.nn.log_sigmoid(x)         # log sigmoid(x)
    log_sig_neg = log_sig_pos - x               # log sigmoid(-x) (exact identity)
    pow_neg = jnp.exp(gamma * log_sig_neg)      # sigmoid(-x) ** gamma
    pow_pos = jnp.exp(gamma * log_sig_pos)      # sigmoid(x)  ** gamma
    return (-alpha * pow_neg * t * log_sig_pos
            - (1.0 - alpha) * pow_pos * (1.0 - t) * log_sig_neg)


def _focal_loss_kernel(x_ref, t_ref, o_ref, *, alpha: float, gamma: float):
    """reduction='none': write the per-element loss tile."""
    x = x_ref[...].astype(jnp.float32)
    t = t_ref[...].astype(jnp.float32)
    loss = _focal_loss_tile(x, t, alpha, gamma)
    o_ref[...] = loss.astype(o_ref.dtype)


def _focal_loss_sum_kernel(x_ref, t_ref, o_ref, *, alpha: float, gamma: float,
                           n_valid: int, block_rows: int):
    """Fused reduction: accumulate the loss sum in the resident (1,1) output."""
    i = pl.program_id(0)

    @pl.when(i == 0)
    def _():
        o_ref[...] = jnp.zeros_like(o_ref)

    x = x_ref[...].astype(jnp.float32)
    t = t_ref[...].astype(jnp.float32)
    loss = _focal_loss_tile(x, t, alpha, gamma)

    # Mask out flatten-padding and any out-of-bounds rows of a partial last
    # block so they contribute exactly zero to the reduction.
    row = jax.lax.broadcasted_iota(jnp.int32, loss.shape, 0) + i * block_rows
    lane = jax.lax.broadcasted_iota(jnp.int32, loss.shape, 1)
    valid = (row * _LANES + lane) < n_valid
    loss = jnp.where(valid, loss, 0.0)

    o_ref[...] += jnp.sum(loss, keepdims=True)


def binary_focal_loss_with_logits(x, target, alpha: float = 0.25,
                                  gamma: float = 2.0, reduction: str = "none"):
    if x.ndim < 2:
        raise ValueError(f"Invalid input shape, we expect BxCx*. Got: {x.shape}")
    if x.shape[0] != target.shape[0]:
        raise ValueError("Batch size mismatch between input and target.")
    if reduction not in ("none", "sum", "mean"):
        raise NotImplementedError(f"Invalid reduction mode: {reduction}")

    orig_shape = x.shape
    out_dtype = x.dtype
    n = int(x.size)

    xf = x.reshape(-1)
    tf = target.reshape(-1)  # keep native dtype (bool/int8/bf16/f32); cast in-kernel

    # Minimal padding: round rows up to the dtype-aware sublane multiple only.
    sub = max(_sublane_multiple(x.dtype), _sublane_multiple(target.dtype))
    rows = pl.cdiv(n, _LANES)
    rows = pl.cdiv(rows, sub) * sub
    n_pad = rows * _LANES
    if n_pad != n:
        # TODO(synk): only taken when n % (sub*128) != 0; an in-kernel masked tail
        # store would avoid this extra HBM pass entirely.
        xf = jnp.pad(xf, (0, n_pad - n))
        tf = jnp.pad(tf, (0, n_pad - n))

    x2 = xf.reshape(rows, _LANES)
    t2 = tf.reshape(rows, _LANES)

    block_rows = min(_MAX_BLOCK_ROWS, rows)
    num_blocks = pl.cdiv(rows, block_rows)

    in_specs = [
        pl.BlockSpec((block_rows, _LANES), lambda i: (i, 0)),
        pl.BlockSpec((block_rows, _LANES), lambda i: (i, 0)),
    ]

    if reduction == "none":
        kernel = functools.partial(_focal_loss_kernel,
                                   alpha=float(alpha), gamma=float(gamma))
        loss2 = pl.pallas_call(
            kernel,
            out_shape=jax.ShapeDtypeStruct((rows, _LANES), out_dtype),
            grid_spec=pltpu.PrefetchScalarGridSpec(
                num_scalar_prefetch=0,
                grid=(num_blocks,),
                in_specs=in_specs,
                out_specs=pl.BlockSpec((block_rows, _LANES), lambda i: (i, 0)),
            ),
            compiler_params=pltpu.CompilerParams(
                dimension_semantics=("parallel",)),
        )(x2, t2)
        loss = loss2.reshape(-1)
        if n_pad != n:
            loss = loss[:n]
        return loss.reshape(orig_shape)

    # reduction in ('sum', 'mean'): fused in-kernel reduction, scalar output.
    kernel = functools.partial(_focal_loss_sum_kernel,
                               alpha=float(alpha), gamma=float(gamma),
                               n_valid=n, block_rows=int(block_rows))
    total = pl.pallas_call(
        kernel,
        out_shape=jax.ShapeDtypeStruct((1, 1), jnp.float32),
        grid_spec=pltpu.PrefetchScalarGridSpec(
            num_scalar_prefetch=0,
            grid=(num_blocks,),
            in_specs=in_specs,
            # Same output block for every grid step -> resident accumulator.
            out_specs=pl.BlockSpec((1, 1), lambda i: (0, 0)),
        ),
        compiler_params=pltpu.CompilerParams(
            dimension_semantics=("arbitrary",)),
    )(x2, t2)[0, 0]

    if reduction == "mean":
        total = total / jnp.float32(n)
    return total.astype(out_dtype)


class BinaryFocalLossWithLogits:
    """JAX/Pallas port of the PyTorch module (no learnable parameters)."""

    def __init__(self, alpha: float, gamma: float = 2.0, reduction: str = "none"):
        self.alpha = alpha
        self.gamma = gamma
        self.reduction = reduction

    def __call__(self, input, target):
        return binary_focal_loss_with_logits(input, target, self.alpha,
                                              self.gamma, self.reduction)


def _reference(x, t, alpha, gamma):
    probs_pos = jax.nn.sigmoid(x)
    probs_neg = jax.nn.sigmoid(-x)
    return (-alpha * jnp.power(probs_neg, gamma) * t * jax.nn.log_sigmoid(x)
            - (1.0 - alpha) * jnp.power(probs_pos, gamma) * (1.0 - t)
            * jax.nn.log_sigmoid(-x))


if __name__ == "__main__":
    key = jax.random.PRNGKey(0)
    k1, k2 = jax.random.split(key)

    # BxCxHxW logits and binary targets (same convention as PyTorch BxCx*).
    x = jax.random.normal(k1, (2, 4, 16, 16), dtype=jnp.float32)
    target = (jax.random.uniform(k2, (2, 4, 16, 16)) > 0.5).astype(jnp.float32)

    ref = _reference(x, target, 0.25, 2.0)

    # reduction='none'
    loss_fn = BinaryFocalLossWithLogits(alpha=0.25, gamma=2.0, reduction="none")
    out = jax.block_until_ready(loss_fn(x, target))
    assert out.shape == x.shape and out.dtype == x.dtype
    assert jnp.allclose(out, ref, atol=1e-5, rtol=1e-5)

    # reduction='sum' (fused in-kernel reduction)
    out_sum = jax.block_until_ready(
        binary_focal_loss_with_logits(x, target, 0.25, 2.0, reduction="sum"))
    assert jnp.allclose(out_sum, jnp.sum(ref), atol=1e-3, rtol=1e-5)

    # reduction='mean' (fused in-kernel reduction)
    out_mean = jax.block_until_ready(
        binary_focal_loss_with_logits(x, target, 0.25, 2.0, reduction="mean"))
    assert jnp.allclose(out_mean, jnp.mean(ref), atol=1e-5, rtol=1e-5)

    print("KERNEL_OK")
</pallas_src>

<mosaic_0001>
module attributes {stable_mosaic.version = 11 : i64} {
  func.func @_focal_loss_kernel(%arg0: i32, %arg1: memref<16x128xf32, #tpu.memory_space<vmem>>, %arg2: memref<16x128xf32, #tpu.memory_space<vmem>>, %arg3: memref<16x128xf32, #tpu.memory_space<vmem>>) attributes {dimension_semantics = [#tpu.dimension_semantics<parallel>], iteration_bounds = array<i64: 1>, scalar_prefetch = 0 : i64, scratch_operands = 0 : i64, tpu.core_type = #tpu.core_type<tc>, window_params = [{transform_indices = @transform_0, window_bounds = array<i64: 16, 128>}, {transform_indices = @transform_1, window_bounds = array<i64: 16, 128>}, {transform_indices = @transform_2, window_bounds = array<i64: 16, 128>}]} {
    %c0 = arith.constant 0 : index
    %c0_0 = arith.constant 0 : index
    %0 = vector.load %arg1[%c0, %c0_0] : memref<16x128xf32, #tpu.memory_space<vmem>>, vector<16x128xf32>
    %c0_1 = arith.constant 0 : index
    %c0_2 = arith.constant 0 : index
    %1 = vector.load %arg2[%c0_1, %c0_2] : memref<16x128xf32, #tpu.memory_space<vmem>>, vector<16x128xf32>
    %cst = arith.constant 0.000000e+00 : f32
    %2 = vector.broadcast %cst : f32 to vector<16x128xf32>
    %3 = arith.subf %2, %0 : vector<16x128xf32>
    %cst_3 = arith.constant 0.000000e+00 : f32
    %4 = vector.broadcast %cst_3 : f32 to vector<16x128xf32>
    %5 = arith.maximumf %3, %4 : vector<16x128xf32>
    %6 = vector.broadcast %cst_3 : f32 to vector<16x128xf32>
    %7 = arith.subf %3, %6 : vector<16x128xf32>
    %8 = arith.cmpf one, %7, %7 : vector<16x128xf32>
    %9 = vector.broadcast %cst_3 : f32 to vector<16x128xf32>
    %10 = arith.addf %3, %9 : vector<16x128xf32>
    %11 = math.absf %7 : vector<16x128xf32>
    %cst_4 = arith.constant 0.000000e+00 : f32
    %12 = vector.broadcast %cst_4 : f32 to vector<16x128xf32>
    %13 = arith.subf %12, %11 : vector<16x128xf32>
    %14 = math.exp %13 : vector<16x128xf32>
    %15 = math.log1p %14 : vector<16x128xf32>
    %16 = arith.addf %5, %15 : vector<16x128xf32>
    %17 = arith.select %8, %10, %16 : vector<16x128xi1>, vector<16x128xf32>
    %cst_5 = arith.constant 0.000000e+00 : f32
    %18 = vector.broadcast %cst_5 : f32 to vector<16x128xf32>
    %19 = arith.subf %18, %17 : vector<16x128xf32>
    %20 = arith.subf %19, %0 : vector<16x128xf32>
    %cst_6 = arith.constant 2.000000e+00 : f32
    %21 = vector.broadcast %cst_6 : f32 to vector<16x128xf32>
    %22 = arith.mulf %21, %20 : vector<16x128xf32>
    %23 = math.exp %22 : vector<16x128xf32>
    %cst_7 = arith.constant 2.000000e+00 : f32
    %24 = vector.broadcast %cst_7 : f32 to vector<16x128xf32>
    %25 = arith.mulf %24, %19 : vector<16x128xf32>
    %26 = math.exp %25 : vector<16x128xf32>
    %cst_8 = arith.constant -2.500000e-01 : f32
    %27 = vector.broadcast %cst_8 : f32 to vector<16x128xf32>
    %28 = arith.mulf %27, %23 : vector<16x128xf32>
    %29 = arith.mulf %28, %1 : vector<16x128xf32>
    %30 = arith.mulf %29, %19 : vector<16x128xf32>
    %cst_9 = arith.constant 7.500000e-01 : f32
    %31 = vector.broadcast %cst_9 : f32 to vector<16x128xf32>
    %32 = arith.mulf %31, %26 : vector<16x128xf32>
    %cst_10 = arith.constant 1.000000e+00 : f32
    %33 = vector.broadcast %cst_10 : f32 to vector<16x128xf32>
    %34 = arith.subf %33, %1 : vector<16x128xf32>
    %35 = arith.mulf %32, %34 : vector<16x128xf32>
    %36 = arith.mulf %35, %20 : vector<16x128xf32>
    %37 = arith.subf %30, %36 : vector<16x128xf32>
    %c0_11 = arith.constant 0 : index
    %c0_12 = arith.constant 0 : index
    %38 = vector.load %arg3[%c0_11, %c0_12] : memref<16x128xf32, #tpu.memory_space<vmem>>, vector<16x128xf32>
    tpu.vector_store %arg3[%c0_11, %c0_12], %37 {strides = array<i32>} : memref<16x128xf32, #tpu.memory_space<vmem>>, vector<16x128xf32>,
    return
  }
  func.func @transform_0(%arg0: i32) -> (i32, i32) {
    %c0_i32 = arith.constant 0 : i32
    %c0_i32_0 = arith.constant 0 : i32
    return %arg0, %c0_i32 : i32, i32
  }
  func.func @transform_1(%arg0: i32) -> (i32, i32) {
    %c0_i32 = arith.constant 0 : i32
    %c0_i32_0 = arith.constant 0 : i32
    return %arg0, %c0_i32 : i32, i32
  }
  func.func @transform_2(%arg0: i32) -> (i32, i32) {
    %c0_i32 = arith.constant 0 : i32
    %c0_i32_0 = arith.constant 0 : i32
    return %arg0, %c0_i32 : i32, i32
  }
}

</mosaic_0001>

<llo_original>
// kernel: tpu_custom_call.1
$region0: #{tpu_custom_call.1}
  #allocation0 [shape = 'u32[]', space=smem, size = 0x4, offset = 0x4, fixed_abs, tag = 'smem constant byte address 0x4 - core index']
  #allocation1 [shape = 'u32[144,128]{1,0:T(1,128)}', space=vmem, size = 0x12000, scoped, tag = 'internal scratch']
  %s0 = inlined_call_operand.hbm [shape: f32[16,128], index: 0, kind: input, shape index: {}]
  %s1 = inlined_call_operand.hbm [shape: f32[16,128], index: 1, kind: input, shape index: {}]
  %s2 = inlined_call_operand.hbm [shape: f32[16,128], index: 2, kind: output, shape index: {}]
  %s3 = sld [smem:[#allocation0]]
  $region26: #{tpu_custom_call.1} parent=0
    _
  %s5 = ssub.s32 1, %s3
  %s6 = scalar_select 0, %s5, %s3
  $region1: #{tpu_custom_call.1} parent=0
    #allocation2 [shape = 'u8[8192]{0}', space=vmem, size = 0x2000, scoped, tag = 'input window, operand 0, single buffered']
    #allocation3 [shape = 's32[1]{0}', space=sflag, size = 0x4, scoped, tag = 'scoped memory for tpu_custom_call.1']
    #allocation4 [shape = 's32[1]{0}', space=sflag, size = 0x4, scoped, tag = 'scoped memory for tpu_custom_call.1']
    #allocation5 [shape = 'u8[8192]{0}', space=vmem, size = 0x2000, scoped, tag = 'input window, operand 1, single buffered']
    #allocation6 [shape = 's32[1]{0}', space=sflag, size = 0x4, scoped, tag = 'scoped memory for tpu_custom_call.1']
    #allocation7 [shape = 'u8[8192]{0}', space=vmem, size = 0x2000, scoped, tag = 'output window, operand 0, single buffered']
    %7 = vsyncpa [#allocation3], 0
    %8 = vsyncpa [#allocation6], 0
    %9 = vsyncpa [#allocation4], 0
    // Predicated region
    $region2: #{tpu_custom_call.1} parent=1 // pred_check
      _
    $region3: #{tpu_custom_call.1} parent=1 // pred_check_branch
      %11 = sbr.rel (0) target = $region5
    $region4: #{tpu_custom_call.1} parent=1 // pred_region
      %s13 = ssub.s32 256, 256
      %14 = vsyncadd [#allocation3], %s13
      %s15 = sshll.u32 [#allocation2], 4
      %s16 = int_to_ptr.vmem [resolvable:$true] %s15
      %21 = dma.hbm_to_vmem [thread:$0]  %s0, 256, %s16, [#allocation3], 128, 128, 8
    $region5: #{tpu_custom_call.1} parent=1 // pred_fallthru
      _
    // Predicated region
    $region6: #{tpu_custom_call.1} parent=1 // pred_check
      _
    $region7: #{tpu_custom_call.1} parent=1 // pred_check_branch
      %23 = sbr.rel (0) target = $region9
    $region8: #{tpu_custom_call.1} parent=1 // pred_region
      %s25 = ssub.s32 256, 256
      %26 = vsyncadd [#allocation6], %s25
      %s27 = sshll.u32 [#allocation5], 4
      %s28 = int_to_ptr.vmem [resolvable:$true] %s27
      %33 = dma.hbm_to_vmem [thread:$0]  %s1, 256, %s28, [#allocation6], 128, 128, 8
    $region9: #{tpu_custom_call.1} parent=1 // pred_fallthru
      _
    // Predicated region
    $region10: #{tpu_custom_call.1} parent=1 // pred_check
      _
    $region11: #{tpu_custom_call.1} parent=1 // pred_check_branch
      %35 = sbr.rel (0) target = $region13
    $region12: #{tpu_custom_call.1} parent=1 // pred_region
      %36 = dma.done [#allocation3], 256
    $region13: #{tpu_custom_call.1} parent=1 // pred_fallthru
      _
    // Predicated region
    $region14: #{tpu_custom_call.1} parent=1 // pred_check
      _
    $region15: #{tpu_custom_call.1} parent=1 // pred_check_branch
      %38 = sbr.rel (0) target = $region17
    $region16: #{tpu_custom_call.1} parent=1 // pred_region
      %39 = dma.done [#allocation6], 256
    $region17: #{tpu_custom_call.1} parent=1 // pred_fallthru
      _
    %v40 = vld [vmem:[#allocation2] sm:$0xff]
    %v41 = vld [vmem:[#allocation2 + $0x8] sm:$0xff]
    %v42 = vld [vmem:[#allocation5] sm:$0xff]
    %v43 = vld [vmem:[#allocation5 + $0x8] sm:$0xff]
    %v44 = vsub.f32 0.0, %v40
    %v45 = vsub.f32 0.0, %v41
    %v46 = vmax.f32 %v44, 0.0
    %v47 = vmax.f32 %v45, 0.0
    %vm48 = vcmp.ne.f32.partialorder %v44, %v44
    %vm49 = vcmp.ne.f32.partialorder %v45, %v45
    %v50 = vadd.f32 %v44, 0.0
    %v51 = vadd.f32 %v45, 0.0
    %v52 = vand.u32 2147483647, %v44
    %v53 = vand.u32 2147483647, %v45
    %v54 = vsub.f32 0.0, %v52
    %v55 = vsub.f32 0.0, %v53
    %v56 = vmul.f32 %v54, 1.442695
    %v57 = vpow.pop %v56
    %v58 = vmul.f32 %v55, 1.442695
    %v59 = vpow.pop %v58
    %v60 = vadd.f32 %v57, 1.0
    %v61 = vlog2.pop %v60
    %v62 = vmul.f32 %v61, 0.6931472
    %v63 = vmul.f32 -0.5, %v57
    %v64 = vadd.f32 %v63, 1.0
    %v65 = vmul.f32 %v64, %v57
    %v66 = vand.u32 2147483647, %v57
    %vm67 = vcmp.lt.f32.partialorder %v66, 0.0004427343
    %v68 = vsel %vm67, %v65, %v62
    %v69 = vadd.f32 %v59, 1.0
    %v70 = vlog2.pop %v69
    %v71 = vmul.f32 %v70, 0.6931472
    %v72 = vmul.f32 -0.5, %v59
    %v73 = vadd.f32 %v72, 1.0
    %v74 = vmul.f32 %v73, %v59
    %v75 = vand.u32 2147483647, %v59
    %vm76 = vcmp.lt.f32.partialorder %v75, 0.0004427343
    %v77 = vsel %vm76, %v74, %v71
    %v78 = vadd.f32 %v46, %v68
    %v79 = vadd.f32 %v47, %v77
    %v80 = vsel %vm48, %v50, %v78
    %v81 = vsel %vm49, %v51, %v79
    %v82 = vsub.f32 0.0, %v80
    %v83 = vsub.f32 0.0, %v81
    %v84 = vsub.f32 %v82, %v40
    %v85 = vsub.f32 %v83, %v41
    %v86 = vmul.f32 %v84, 2.0
    %v87 = vmul.f32 %v85, 2.0
    %v88 = vmul.f32 %v86, 1.442695
    %v89 = vpow.pop %v88
    %v90 = vmul.f32 %v87, 1.442695
    %v91 = vpow.pop %v90
    %v92 = vmul.f32 %v82, 2.0
    %v93 = vmul.f32 %v83, 2.0
    %v94 = vmul.f32 %v92, 1.442695
    %v95 = vpow.pop %v94
    %v96 = vmul.f32 %v93, 1.442695
    %v97 = vpow.pop %v96
    %v98 = vmul.f32 %v89, -0.25
    %v99 = vmul.f32 %v91, -0.25
    %v100 = vmul.f32 %v98, %v42
    %v101 = vmul.f32 %v99, %v43
    %v102 = vmul.f32 %v100, %v82
    %v103 = vmul.f32 %v101, %v83
    %v104 = vmul.f32 %v95, 0.75
    %v105 = vmul.f32 %v97, 0.75
    %v106 = vsub.f32 1.0, %v42
    %v107 = vsub.f32 1.0, %v43
    %v108 = vmul.f32 %v104, %v106
    %v109 = vmul.f32 %v105, %v107
    %v110 = vmul.f32 %v108, %v84
    %v111 = vmul.f32 %v109, %v85
    %v112 = vsub.f32 %v102, %v110
    %v113 = vsub.f32 %v103, %v111
    %114 = vst [vmem:[#allocation7] sm:$0xff] %v112
    %115 = vst [vmem:[#allocation7 + $0x8] sm:$0xff] %v113
    // Predicated region
    $region18: #{tpu_custom_call.1} parent=1 // pred_check
      _
    $region19: #{tpu_custom_call.1} parent=1 // pred_check_branch
      %117 = sbr.rel (0) target = $region21
    $region20: #{tpu_custom_call.1} parent=1 // pred_region
      %s119 = ssub.s32 256, 256
      %120 = vsyncadd [#allocation4], %s119
      %s121 = sshll.u32 [#allocation7], 4
      %s122 = int_to_ptr.vmem [resolvable:$true] %s121
      %127 = dma.vmem_to_hbm [thread:$0]  %s122, 256, %s2, [#allocation4], 128, 128, 8
    $region21: #{tpu_custom_call.1} parent=1 // pred_fallthru
      _
    // Predicated region
    $region22: #{tpu_custom_call.1} parent=1 // pred_check
      _
    $region23: #{tpu_custom_call.1} parent=1 // pred_check_branch
      %129 = sbr.rel (0) target = $region25
    $region24: #{tpu_custom_call.1} parent=1 // pred_region
      %130 = dma.done [#allocation4], 256
    $region25: #{tpu_custom_call.1} parent=1 // pred_fallthru
      _
    %131 = vsyncpa [#allocation3], 1
    %132 = vsyncpa [#allocation6], 1
    %133 = vsyncpa [#allocation4], 1

</llo_original>
